<compile_context>
chip_gen: v7x
topology: tpu7x:2x2x1
jax: 0.10.0
libtpu: 0.0.40
codegen_flags: <defaults>
</compile_context>

<pallas_src>
import functools

import jax
import jax.numpy as jnp
from jax.experimental import pallas as pl
from jax.experimental.pallas import tpu as pltpu

EPS = 1e-9


def _round_up(x, m):
    return ((x + m - 1) // m) * m


def _vmem_capacity_bytes():
    try:
        info = pltpu.get_tpu_info()
        cap = getattr(info, "vmem_capacity_bytes", None)
        if cap:
            return int(cap)
    except Exception:
        pass
    return 64 << 20  # conservative default: v7x per-TensorCore VMEM


def _denseloss_kernel(pred_ref, out_ref, *, dropout, samples_on_lanes):
    """One block of gathered target-class probabilities -> per-sample mean.

    samples_on_lanes=True : pred_ref is (num, TB), reduce over axis 0.
    samples_on_lanes=False: pred_ref is (TB, num), reduce over axis 1.
    """
    x = pred_ref[...].astype(jnp.float32)
    if samples_on_lanes:
        num = x.shape[0]
        axis = 0
    else:
        num = x.shape[1]
        axis = 1

    # Inputs are probabilities (<= 1) so xent >= 0; the upper clamp at
    # 1 - 1e-9 is a no-op in f32 and is omitted.
    xent = -jnp.log(jnp.maximum(x, EPS))

    n_drop = max(int(dropout), 0)
    keep = num - n_drop

    # Iteratively zero out the largest remaining xent per sample (first
    # occurrence), vectorized across the sample axis.
    ids = jax.lax.broadcasted_iota(jnp.int32, xent.shape, axis)
    vals = xent
    for _ in range(n_drop):
        mx = jnp.max(vals, axis=axis, keepdims=True)
        cand = jnp.where(vals == mx, ids, num)
        first = jnp.min(cand, axis=axis, keepdims=True)
        vals = jnp.where(ids == first, 0.0, vals)

    kept_sum = jnp.sum(vals, axis=axis, keepdims=True)
    out_ref[...] = kept_sum * (1.0 / float(keep))


def _choose_block(n, num, itemsize, samples_on_lanes, block_target):
    """Pick (TB samples per grid step, padded sample count)."""
    per_sample_bytes = num * itemsize
    if samples_on_lanes:
        unit, min_split = 128, 512   # TB lives on the 128-lane axis
    else:
        unit, min_split = 8, 64      # TB lives on the sublane axis
    tb_cap = block_target // max(per_sample_bytes, 1)
    tb_cap = max((tb_cap // unit) * unit, unit)
    n_unit = _round_up(max(n, 1), unit)
    if n_unit <= tb_cap:
        if n_unit >= min_split:
            # Keep >= 2 grid steps so both v7x TensorCores get work.
            tb = max(((n_unit // 2) // unit) * unit, unit)
            return tb, _round_up(n_unit, tb)
        return n_unit, n_unit
    return tb_cap, _round_up(n, tb_cap)


@functools.partial(jax.jit, static_argnames=("dropout",))
def _denseloss_impl(dense_pred, targets, dropout):
    n, num, c = dense_pred.shape

    # Gather only the target-class column, keeping the input dtype on the
    # wire (the kernel widens to f32): (n, num, c) -> (n, num).
    tgt = targets.astype(jnp.int32)
    gathered = jnp.take_along_axis(dense_pred, tgt[:, None, None], axis=2)
    gathered = gathered[..., 0]                                   # (n, num)

    samples_on_lanes = num < 128
    itemsize = jnp.dtype(gathered.dtype).itemsize

    vmem_cap = _vmem_capacity_bytes()
    block_target = int(min(max(vmem_cap // 8, 4 << 20), 16 << 20))

    tb, n_pad = _choose_block(n, num, itemsize, samples_on_lanes, block_target)
    if n_pad > n:
        # Padded samples get probability 1.0 -> xent 0 -> mean 0; they are
        # sliced off before the final mean over real samples.
        gathered = jnp.pad(gathered, ((0, n_pad - n), (0, 0)),
                           constant_values=1.0)

    block_bytes = tb * num * itemsize
    if 2 * block_bytes + (4 << 20) > vmem_cap:
        # TODO(synk): tile the `num` axis (two-pass drop-k) for extreme num.
        raise ValueError(f"num={num} too large: block does not fit in VMEM")
    vmem_limit = int(min(max(4 * block_bytes + (4 << 20), 16 << 20),
                         vmem_cap // 2))

    kernel = functools.partial(_denseloss_kernel, dropout=dropout,
                               samples_on_lanes=samples_on_lanes)

    if samples_on_lanes:
        data = gathered.T                                         # (num, n_pad)
        in_spec = pl.BlockSpec((num, tb), lambda i: (0, i))
        out_spec = pl.BlockSpec((1, tb), lambda i: (0, i))
        out_shape = jax.ShapeDtypeStruct((1, n_pad), jnp.float32)
    else:
        data = gathered                                           # (n_pad, num)
        in_spec = pl.BlockSpec((tb, num), lambda i: (i, 0))
        out_spec = pl.BlockSpec((tb, 1), lambda i: (i, 0))
        out_shape = jax.ShapeDtypeStruct((n_pad, 1), jnp.float32)

    per_sample = pl.pallas_call(
        kernel,
        out_shape=out_shape,
        grid_spec=pl.GridSpec(
            grid=(n_pad // tb,),
            in_specs=[in_spec],
            out_specs=out_spec,
        ),
        compiler_params=pltpu.CompilerParams(
            dimension_semantics=("parallel",),
            vmem_limit_bytes=vmem_limit),
    )(data)

    if samples_on_lanes:
        per_sample = per_sample[0, :n]
    else:
        per_sample = per_sample[:n, 0]
    # Final mean over real samples done once in f32 (no sequential drift).
    return jnp.mean(per_sample)


def denseloss(dense_pred, targets, dropout=6):
    n, num, c = dense_pred.shape
    if dropout >= num:
        raise ValueError(f"dropout ({dropout}) must be < num ({num})")
    return _denseloss_impl(dense_pred, targets, dropout=int(dropout))


def denseloss_ref(dense_pred, targets, dropout=6):
    """Pure-JAX reference mirroring the PyTorch forward."""
    n, num, c = dense_pred.shape
    onehot = jax.nn.one_hot(targets, c, dtype=jnp.float32)        # (n, c)
    pt = jnp.clip(dense_pred.astype(jnp.float32), EPS, 1.0 - EPS)
    xent = jnp.sum(-jnp.log(pt) * onehot[:, None, :], axis=-1)    # (n, num)
    sorted_x = jnp.sort(xent, axis=1)
    sel = sorted_x[:, :-dropout] if dropout > 0 else sorted_x
    return sel.mean(axis=1).mean(axis=0)


if __name__ == "__main__":
    key = jax.random.PRNGKey(0)
    k1, k2, k3, k4, k5, k6 = jax.random.split(key, 6)

    # Test 1: module-consistent small shapes, default dropout (flipped layout).
    n, num, c = 4, 16, 32
    logits = jax.random.normal(k1, (n, num, c), dtype=jnp.float32)
    dense_pred = jax.nn.softmax(logits, axis=-1)
    targets = jax.random.randint(k2, (n,), 0, c, dtype=jnp.int32)
    out = jax.block_until_ready(denseloss(dense_pred, targets, dropout=6))
    ref = denseloss_ref(dense_pred, targets, dropout=6)
    assert jnp.allclose(out, ref, rtol=1e-5, atol=1e-5), (out, ref)

    # Test 2: padding path (n not multiple of tile) and dropout=0.
    n2, num2, c2 = 10, 24, 7
    logits2 = jax.random.normal(k3, (n2, num2, c2), dtype=jnp.float32)
    dense_pred2 = jax.nn.softmax(logits2, axis=-1)
    targets2 = jax.random.randint(k4, (n2,), 0, c2, dtype=jnp.int32)
    out2 = jax.block_until_ready(denseloss(dense_pred2, targets2, dropout=0))
    ref2 = denseloss_ref(dense_pred2, targets2, dropout=0)
    assert jnp.allclose(out2, ref2, rtol=1e-5, atol=1e-5), (out2, ref2)

    # Test 3: num >= 128 exercises the lane-major (TB, num) path.
    n3, num3, c3 = 6, 128, 5
    logits3 = jax.random.normal(k5, (n3, num3, c3), dtype=jnp.float32)
    dense_pred3 = jax.nn.softmax(logits3, axis=-1)
    targets3 = jax.random.randint(k6, (n3,), 0, c3, dtype=jnp.int32)
    out3 = jax.block_until_ready(denseloss(dense_pred3, targets3, dropout=6))
    ref3 = denseloss_ref(dense_pred3, targets3, dropout=6)
    assert jnp.allclose(out3, ref3, rtol=1e-5, atol=1e-5), (out3, ref3)

    # Test 4: bf16 input stays bf16 on the wire; kernel widens to f32.
    dense_pred4 = dense_pred.astype(jnp.bfloat16)
    out4 = jax.block_until_ready(denseloss(dense_pred4, targets, dropout=6))
    ref4 = denseloss_ref(dense_pred4, targets, dropout=6)
    assert jnp.allclose(out4, ref4, rtol=1e-5, atol=1e-5), (out4, ref4)

    print("KERNEL_OK")
</pallas_src>

<mosaic_0001>
module attributes {stable_mosaic.version = 11 : i64} {
  func.func @_denseloss_kernel(%arg0: i32, %arg1: memref<16x128xf32, #tpu.memory_space<vmem>>, %arg2: memref<1x128xf32, #tpu.memory_space<vmem>>) attributes {dimension_semantics = [#tpu.dimension_semantics<parallel>], iteration_bounds = array<i64: 1>, scalar_prefetch = 0 : i64, scratch_operands = 0 : i64, tpu.core_type = #tpu.core_type<tc>, window_params = [{transform_indices = @transform_0, window_bounds = array<i64: 16, 128>}, {transform_indices = @transform_1, window_bounds = array<i64: 1, 128>}]} {
    %c0 = arith.constant 0 : index
    %c0_0 = arith.constant 0 : index
    %0 = vector.load %arg1[%c0, %c0_0] : memref<16x128xf32, #tpu.memory_space<vmem>>, vector<16x128xf32>
    %cst = arith.constant 9.99999971E-10 : f32
    %1 = vector.broadcast %cst : f32 to vector<16x128xf32>
    %2 = arith.maximumf %0, %1 : vector<16x128xf32>
    %3 = math.log %2 : vector<16x128xf32>
    %cst_1 = arith.constant 0.000000e+00 : f32
    %4 = vector.broadcast %cst_1 : f32 to vector<16x128xf32>
    %5 = arith.subf %4, %3 : vector<16x128xf32>
    %6 = tpu.iota {dimensions = array<i32: 0>} : vector<16x128xi32>
    %cst_2 = arith.constant dense<0xFF800000> : vector<128xf32>
    %7 = vector.multi_reduction <maximumf>, %5, %cst_2 [0] : vector<16x128xf32> to vector<128xf32>
    %8 = vector.shape_cast %7 : vector<128xf32> to vector<1x128xf32>
    %9 = vector.broadcast %8 : vector<1x128xf32> to vector<16x128xf32>
    %10 = arith.cmpf oeq, %5, %9 : vector<16x128xf32>
    %c16_i32 = arith.constant 16 : i32
    %11 = vector.broadcast %c16_i32 : i32 to vector<16x128xi32>
    %12 = arith.select %10, %6, %11 : vector<16x128xi1>, vector<16x128xi32>
    %cst_3 = arith.constant dense<2147483647> : vector<128xi32>
    %13 = vector.multi_reduction <minsi>, %12, %cst_3 [0] : vector<16x128xi32> to vector<128xi32>
    %14 = vector.shape_cast %13 : vector<128xi32> to vector<1x128xi32>
    %15 = vector.broadcast %14 : vector<1x128xi32> to vector<16x128xi32>
    %16 = arith.cmpi eq, %6, %15 : vector<16x128xi32>
    %cst_4 = arith.constant 0.000000e+00 : f32
    %17 = vector.broadcast %cst_4 : f32 to vector<16x128xf32>
    %18 = arith.select %16, %17, %5 : vector<16x128xi1>, vector<16x128xf32>
    %cst_5 = arith.constant dense<0xFF800000> : vector<128xf32>
    %19 = vector.multi_reduction <maximumf>, %18, %cst_5 [0] : vector<16x128xf32> to vector<128xf32>
    %20 = vector.shape_cast %19 : vector<128xf32> to vector<1x128xf32>
    %21 = vector.broadcast %20 : vector<1x128xf32> to vector<16x128xf32>
    %22 = arith.cmpf oeq, %18, %21 : vector<16x128xf32>
    %c16_i32_6 = arith.constant 16 : i32
    %23 = vector.broadcast %c16_i32_6 : i32 to vector<16x128xi32>
    %24 = arith.select %22, %6, %23 : vector<16x128xi1>, vector<16x128xi32>
    %cst_7 = arith.constant dense<2147483647> : vector<128xi32>
    %25 = vector.multi_reduction <minsi>, %24, %cst_7 [0] : vector<16x128xi32> to vector<128xi32>
    %26 = vector.shape_cast %25 : vector<128xi32> to vector<1x128xi32>
    %27 = vector.broadcast %26 : vector<1x128xi32> to vector<16x128xi32>
    %28 = arith.cmpi eq, %6, %27 : vector<16x128xi32>
    %cst_8 = arith.constant 0.000000e+00 : f32
    %29 = vector.broadcast %cst_8 : f32 to vector<16x128xf32>
    %30 = arith.select %28, %29, %18 : vector<16x128xi1>, vector<16x128xf32>
    %cst_9 = arith.constant dense<0xFF800000> : vector<128xf32>
    %31 = vector.multi_reduction <maximumf>, %30, %cst_9 [0] : vector<16x128xf32> to vector<128xf32>
    %32 = vector.shape_cast %31 : vector<128xf32> to vector<1x128xf32>
    %33 = vector.broadcast %32 : vector<1x128xf32> to vector<16x128xf32>
    %34 = arith.cmpf oeq, %30, %33 : vector<16x128xf32>
    %c16_i32_10 = arith.constant 16 : i32
    %35 = vector.broadcast %c16_i32_10 : i32 to vector<16x128xi32>
    %36 = arith.select %34, %6, %35 : vector<16x128xi1>, vector<16x128xi32>
    %cst_11 = arith.constant dense<2147483647> : vector<128xi32>
    %37 = vector.multi_reduction <minsi>, %36, %cst_11 [0] : vector<16x128xi32> to vector<128xi32>
    %38 = vector.shape_cast %37 : vector<128xi32> to vector<1x128xi32>
    %39 = vector.broadcast %38 : vector<1x128xi32> to vector<16x128xi32>
    %40 = arith.cmpi eq, %6, %39 : vector<16x128xi32>
    %cst_12 = arith.constant 0.000000e+00 : f32
    %41 = vector.broadcast %cst_12 : f32 to vector<16x128xf32>
    %42 = arith.select %40, %41, %30 : vector<16x128xi1>, vector<16x128xf32>
    %cst_13 = arith.constant dense<0xFF800000> : vector<128xf32>
    %43 = vector.multi_reduction <maximumf>, %42, %cst_13 [0] : vector<16x128xf32> to vector<128xf32>
    %44 = vector.shape_cast %43 : vector<128xf32> to vector<1x128xf32>
    %45 = vector.broadcast %44 : vector<1x128xf32> to vector<16x128xf32>
    %46 = arith.cmpf oeq, %42, %45 : vector<16x128xf32>
    %c16_i32_14 = arith.constant 16 : i32
    %47 = vector.broadcast %c16_i32_14 : i32 to vector<16x128xi32>
    %48 = arith.select %46, %6, %47 : vector<16x128xi1>, vector<16x128xi32>
    %cst_15 = arith.constant dense<2147483647> : vector<128xi32>
    %49 = vector.multi_reduction <minsi>, %48, %cst_15 [0] : vector<16x128xi32> to vector<128xi32>
    %50 = vector.shape_cast %49 : vector<128xi32> to vector<1x128xi32>
    %51 = vector.broadcast %50 : vector<1x128xi32> to vector<16x128xi32>
    %52 = arith.cmpi eq, %6, %51 : vector<16x128xi32>
    %cst_16 = arith.constant 0.000000e+00 : f32
    %53 = vector.broadcast %cst_16 : f32 to vector<16x128xf32>
    %54 = arith.select %52, %53, %42 : vector<16x128xi1>, vector<16x128xf32>
    %cst_17 = arith.constant dense<0xFF800000> : vector<128xf32>
    %55 = vector.multi_reduction <maximumf>, %54, %cst_17 [0] : vector<16x128xf32> to vector<128xf32>
    %56 = vector.shape_cast %55 : vector<128xf32> to vector<1x128xf32>
    %57 = vector.broadcast %56 : vector<1x128xf32> to vector<16x128xf32>
    %58 = arith.cmpf oeq, %54, %57 : vector<16x128xf32>
    %c16_i32_18 = arith.constant 16 : i32
    %59 = vector.broadcast %c16_i32_18 : i32 to vector<16x128xi32>
    %60 = arith.select %58, %6, %59 : vector<16x128xi1>, vector<16x128xi32>
    %cst_19 = arith.constant dense<2147483647> : vector<128xi32>
    %61 = vector.multi_reduction <minsi>, %60, %cst_19 [0] : vector<16x128xi32> to vector<128xi32>
    %62 = vector.shape_cast %61 : vector<128xi32> to vector<1x128xi32>
    %63 = vector.broadcast %62 : vector<1x128xi32> to vector<16x128xi32>
    %64 = arith.cmpi eq, %6, %63 : vector<16x128xi32>
    %cst_20 = arith.constant 0.000000e+00 : f32
    %65 = vector.broadcast %cst_20 : f32 to vector<16x128xf32>
    %66 = arith.select %64, %65, %54 : vector<16x128xi1>, vector<16x128xf32>
    %cst_21 = arith.constant dense<0xFF800000> : vector<128xf32>
    %67 = vector.multi_reduction <maximumf>, %66, %cst_21 [0] : vector<16x128xf32> to vector<128xf32>
    %68 = vector.shape_cast %67 : vector<128xf32> to vector<1x128xf32>
    %69 = vector.broadcast %68 : vector<1x128xf32> to vector<16x128xf32>
    %70 = arith.cmpf oeq, %66, %69 : vector<16x128xf32>
    %c16_i32_22 = arith.constant 16 : i32
    %71 = vector.broadcast %c16_i32_22 : i32 to vector<16x128xi32>
    %72 = arith.select %70, %6, %71 : vector<16x128xi1>, vector<16x128xi32>
    %cst_23 = arith.constant dense<2147483647> : vector<128xi32>
    %73 = vector.multi_reduction <minsi>, %72, %cst_23 [0] : vector<16x128xi32> to vector<128xi32>
    %74 = vector.shape_cast %73 : vector<128xi32> to vector<1x128xi32>
    %75 = vector.broadcast %74 : vector<1x128xi32> to vector<16x128xi32>
    %76 = arith.cmpi eq, %6, %75 : vector<16x128xi32>
    %cst_24 = arith.constant 0.000000e+00 : f32
    %77 = vector.broadcast %cst_24 : f32 to vector<16x128xf32>
    %78 = arith.select %76, %77, %66 : vector<16x128xi1>, vector<16x128xf32>
    %cst_25 = arith.constant dense<0.000000e+00> : vector<128xf32>
    %79 = vector.multi_reduction <add>, %78, %cst_25 [0] : vector<16x128xf32> to vector<128xf32>
    %80 = vector.shape_cast %79 : vector<128xf32> to vector<1x128xf32>
    %cst_26 = arith.constant 1.000000e-01 : f32
    %81 = vector.broadcast %cst_26 : f32 to vector<1x128xf32>
    %82 = arith.mulf %80, %81 : vector<1x128xf32>
    %c0_27 = arith.constant 0 : index
    %c0_28 = arith.constant 0 : index
    %83 = vector.load %arg2[%c0_27, %c0_28] : memref<1x128xf32, #tpu.memory_space<vmem>>, vector<1x128xf32>
    tpu.vector_store %arg2[%c0_27, %c0_28], %82 {strides = array<i32>} : memref<1x128xf32, #tpu.memory_space<vmem>>, vector<1x128xf32>,
    return
  }
  func.func @transform_0(%arg0: i32) -> (i32, i32) {
    %c0_i32 = arith.constant 0 : i32
    %c0_i32_0 = arith.constant 0 : i32
    return %c0_i32, %arg0 : i32, i32
  }
  func.func @transform_1(%arg0: i32) -> (i32, i32) {
    %c0_i32 = arith.constant 0 : i32
    %c0_i32_0 = arith.constant 0 : i32
    return %c0_i32, %arg0 : i32, i32
  }
}

</mosaic_0001>

<llo_original>
// kernel: _denseloss_impl.1
$region0: #{_denseloss_impl.1}
  #allocation0 [shape = 'u32[]', space=smem, size = 0x4, offset = 0x4, fixed_abs, tag = 'smem constant byte address 0x4 - core index']
  #allocation1 [shape = 'u32[144,128]{1,0:T(1,128)}', space=vmem, size = 0x12000, scoped, tag = 'internal scratch']
  %s0 = inlined_call_operand.vmem [shape: f32[16,128], index: 0, kind: input, shape index: {}]
  %s1 = inlined_call_operand.vmem [shape: f32[1,128], index: 1, kind: output, shape index: {}]
  %s2 = sld [smem:[#allocation0]]
  $region14: #{_denseloss_impl.1} parent=0
    _
  %s4 = ssub.s32 1, %s2
  %s5 = scalar_select 0, %s4, %s2
  // Predicated region
  $region2: #{_denseloss_impl.1} parent=0 // pred_check
    _
  $region3: #{_denseloss_impl.1} parent=0 // pred_check_branch
    %7 = sbr.rel (0) target = $region5
  $region4: #{_denseloss_impl.1} parent=0 // pred_region
    _
  $region5: #{_denseloss_impl.1} parent=0 // pred_fallthru
    _
  %v8 = vld [vmem:[%s0] sm:$0xff]
  %v9 = vld [vmem:[%s0 + $0x8] sm:$0xff]
  %v10 = vmax.f32 %v8, 1e-09
  %v11 = vmax.f32 %v9, 1e-09
  %v12 = vlog2.pop %v10
  %v13 = vmul.f32 %v12, 0.6931472
  %v14 = vlog2.pop %v11
  %v15 = vmul.f32 %v14, 0.6931472
  %v16 = vsub.f32 0.0, %v13
  %v17 = vsub.f32 0.0, %v15
  %v18 = vlaneseq
  %v19 = vshrl.u32 %v18, 7
  %v20 = vadd.s32 %v19, 8
  %v21 = vmax.f32 %v16, %v17
  %v22 = vrot.slane %v21, 4
  %v23 = vmax.f32 %v21, %v22
  %v24 = vrot.slane %v23, 2
  %v25 = vmax.f32 %v23, %v24
  %v26 = vrot.slane %v25, 1
  %v27 = vmax.f32 %v25, %v26
  %vm28 = vcmp.eq.f32.partialorder %v16, %v27
  %vm29 = vcmp.eq.f32.partialorder %v17, %v27
  %v30 = vsel %vm28, %v19, 16
  %v31 = vsel %vm29, %v20, 16
  %vm32 = vcmp.lt.s32.totalorder %v30, %v31
  %v33 = vsel %vm32, %v30, %v31
  %v34 = vrot.slane %v33, 4
  %vm35 = vcmp.lt.s32.totalorder %v33, %v34
  %v36 = vsel %vm35, %v33, %v34
  %v37 = vrot.slane %v36, 2
  %vm38 = vcmp.lt.s32.totalorder %v36, %v37
  %v39 = vsel %vm38, %v36, %v37
  %v40 = vrot.slane %v39, 1
  %vm41 = vcmp.lt.s32.totalorder %v39, %v40
  %v42 = vsel %vm41, %v39, %v40
  %vm43 = vcmp.eq.s32.totalorder %v19, %v42
  %vm44 = vcmp.eq.s32.totalorder %v20, %v42
  %v45 = vsel %vm43, 0.0, %v16
  %v46 = vsel %vm44, 0.0, %v17
  %v47 = vmax.f32 %v45, %v46
  %v48 = vrot.slane %v47, 4
  %v49 = vmax.f32 %v47, %v48
  %v50 = vrot.slane %v49, 2
  %v51 = vmax.f32 %v49, %v50
  %v52 = vrot.slane %v51, 1
  %v53 = vmax.f32 %v51, %v52
  %vm54 = vcmp.eq.f32.partialorder %v45, %v53
  %vm55 = vcmp.eq.f32.partialorder %v46, %v53
  %v56 = vsel %vm54, %v19, 16
  %v57 = vsel %vm55, %v20, 16
  %vm58 = vcmp.lt.s32.totalorder %v56, %v57
  %v59 = vsel %vm58, %v56, %v57
  %v60 = vrot.slane %v59, 4
  %vm61 = vcmp.lt.s32.totalorder %v59, %v60
  %v62 = vsel %vm61, %v59, %v60
  %v63 = vrot.slane %v62, 2
  %vm64 = vcmp.lt.s32.totalorder %v62, %v63
  %v65 = vsel %vm64, %v62, %v63
  %v66 = vrot.slane %v65, 1
  %vm67 = vcmp.lt.s32.totalorder %v65, %v66
  %v68 = vsel %vm67, %v65, %v66
  %vm69 = vcmp.eq.s32.totalorder %v19, %v68
  %vm70 = vcmp.eq.s32.totalorder %v20, %v68
  %v71 = vsel %vm69, 0.0, %v45
  %v72 = vsel %vm70, 0.0, %v46
  %v73 = vmax.f32 %v71, %v72
  %v74 = vrot.slane %v73, 4
  %v75 = vmax.f32 %v73, %v74
  %v76 = vrot.slane %v75, 2
  %v77 = vmax.f32 %v75, %v76
  %v78 = vrot.slane %v77, 1
  %v79 = vmax.f32 %v77, %v78
  %vm80 = vcmp.eq.f32.partialorder %v71, %v79
  %vm81 = vcmp.eq.f32.partialorder %v72, %v79
  %v82 = vsel %vm80, %v19, 16
  %v83 = vsel %vm81, %v20, 16
  %vm84 = vcmp.lt.s32.totalorder %v82, %v83
  %v85 = vsel %vm84, %v82, %v83
  %v86 = vrot.slane %v85, 4
  %vm87 = vcmp.lt.s32.totalorder %v85, %v86
  %v88 = vsel %vm87, %v85, %v86
  %v89 = vrot.slane %v88, 2
  %vm90 = vcmp.lt.s32.totalorder %v88, %v89
  %v91 = vsel %vm90, %v88, %v89
  %v92 = vrot.slane %v91, 1
  %vm93 = vcmp.lt.s32.totalorder %v91, %v92
  %v94 = vsel %vm93, %v91, %v92
  %vm95 = vcmp.eq.s32.totalorder %v19, %v94
  %vm96 = vcmp.eq.s32.totalorder %v20, %v94
  %v97 = vsel %vm95, 0.0, %v71
  %v98 = vsel %vm96, 0.0, %v72
  %v99 = vmax.f32 %v97, %v98
  %v100 = vrot.slane %v99, 4
  %v101 = vmax.f32 %v99, %v100
  %v102 = vrot.slane %v101, 2
  %v103 = vmax.f32 %v101, %v102
  %v104 = vrot.slane %v103, 1
  %v105 = vmax.f32 %v103, %v104
  %vm106 = vcmp.eq.f32.partialorder %v97, %v105
  %vm107 = vcmp.eq.f32.partialorder %v98, %v105
  %v108 = vsel %vm106, %v19, 16
  %v109 = vsel %vm107, %v20, 16
  %vm110 = vcmp.lt.s32.totalorder %v108, %v109
  %v111 = vsel %vm110, %v108, %v109
  %v112 = vrot.slane %v111, 4
  %vm113 = vcmp.lt.s32.totalorder %v111, %v112
  %v114 = vsel %vm113, %v111, %v112
  %v115 = vrot.slane %v114, 2
  %vm116 = vcmp.lt.s32.totalorder %v114, %v115
  %v117 = vsel %vm116, %v114, %v115
  %v118 = vrot.slane %v117, 1
  %vm119 = vcmp.lt.s32.totalorder %v117, %v118
  %v120 = vsel %vm119, %v117, %v118
  %vm121 = vcmp.eq.s32.totalorder %v19, %v120
  %vm122 = vcmp.eq.s32.totalorder %v20, %v120
  %v123 = vsel %vm121, 0.0, %v97
  %v124 = vsel %vm122, 0.0, %v98
  %v125 = vmax.f32 %v123, %v124
  %v126 = vrot.slane %v125, 4
  %v127 = vmax.f32 %v125, %v126
  %v128 = vrot.slane %v127, 2
  %v129 = vmax.f32 %v127, %v128
  %v130 = vrot.slane %v129, 1
  %v131 = vmax.f32 %v129, %v130
  %vm132 = vcmp.eq.f32.partialorder %v123, %v131
  %vm133 = vcmp.eq.f32.partialorder %v124, %v131
  %v134 = vsel %vm132, %v19, 16
  %v135 = vsel %vm133, %v20, 16
  %vm136 = vcmp.lt.s32.totalorder %v134, %v135
  %v137 = vsel %vm136, %v134, %v135
  %v138 = vrot.slane %v137, 4
  %vm139 = vcmp.lt.s32.totalorder %v137, %v138
  %v140 = vsel %vm139, %v137, %v138
  %v141 = vrot.slane %v140, 2
  %vm142 = vcmp.lt.s32.totalorder %v140, %v141
  %v143 = vsel %vm142, %v140, %v141
  %v144 = vrot.slane %v143, 1
  %vm145 = vcmp.lt.s32.totalorder %v143, %v144
  %v146 = vsel %vm145, %v143, %v144
  %vm147 = vcmp.eq.s32.totalorder %v19, %v146
  %vm148 = vcmp.eq.s32.totalorder %v20, %v146
  %v149 = vsel %vm147, 0.0, %v123
  %v150 = vsel %vm148, 0.0, %v124
  %v151 = vmax.f32 %v149, %v150
  %v152 = vrot.slane %v151, 4
  %v153 = vmax.f32 %v151, %v152
  %v154 = vrot.slane %v153, 2
  %v155 = vmax.f32 %v153, %v154
  %v156 = vrot.slane %v155, 1
  %v157 = vmax.f32 %v155, %v156
  %vm158 = vcmp.eq.f32.partialorder %v149, %v157
  %vm159 = vcmp.eq.f32.partialorder %v150, %v157
  %v160 = vsel %vm158, %v19, 16
  %v161 = vsel %vm159, %v20, 16
  %vm162 = vcmp.lt.s32.totalorder %v160, %v161
  %v163 = vsel %vm162, %v160, %v161
  %v164 = vrot.slane %v163, 4
  %vm165 = vcmp.lt.s32.totalorder %v163, %v164
  %v166 = vsel %vm165, %v163, %v164
  %v167 = vrot.slane %v166, 2
  %vm168 = vcmp.lt.s32.totalorder %v166, %v167
  %v169 = vsel %vm168, %v166, %v167
  %v170 = vrot.slane %v169, 1
  %vm171 = vcmp.lt.s32.totalorder %v169, %v170
  %v172 = vsel %vm171, %v169, %v170
  %vm173 = vcmp.eq.s32.totalorder %v19, %v172
  %vm174 = vcmp.eq.s32.totalorder %v20, %v172
  %v175 = vsel %vm173, 0.0, %v149
  %v176 = vsel %vm174, 0.0, %v150
  %v177 = vadd.f32 %v175, %v176
  %v178 = vrot.slane %v177, 4
  %v179 = vadd.f32 %v177, %v178
  %v180 = vrot.slane %v179, 2
  %v181 = vadd.f32 %v179, %v180
  %v182 = vrot.slane %v181, 1
  %v183 = vadd.f32 %v181, %v182
  %v184 = vmul.f32 %v183, 0.1
  %185 = vst [vmem:[%s1] sm:$0x1] %v184
  // Predicated region
  $region6: #{_denseloss_impl.1} parent=0 // pred_check
    _
  $region7: #{_denseloss_impl.1} parent=0 // pred_check_branch
    %187 = sbr.rel (0) target = $region9
  $region8: #{_denseloss_impl.1} parent=0 // pred_region
    _
  $region9: #{_denseloss_impl.1} parent=0 // pred_fallthru
    _
  // Predicated region
  $region10: #{_denseloss_impl.1} parent=0 // pred_check
    _
  $region11: #{_denseloss_impl.1} parent=0 // pred_check_branch
    %189 = sbr.rel (0) target = $region13
  $region12: #{_denseloss_impl.1} parent=0 // pred_region
    _
  $region13: #{_denseloss_impl.1} parent=0 // pred_fallthru
    _

</llo_original>
